<compile_context>
chip_gen: v7x
topology: tpu7x:2x2x1
jax: 0.10.0
libtpu: 0.0.40
codegen_flags: <defaults>
</compile_context>

<pallas_src>
import jax
import jax.numpy as jnp
from jax.experimental import pallas as pl
from jax.experimental.pallas import tpu as pltpu

LANES = 128
SUBLANES = 8
_DEFAULT_BLOCK_ROWS = 8192      # 4 MiB f32 tile -> ~16 MiB double-buffered in+out
_MIN_GRID_STEPS = 4             # >=2 steps per TC on v7x megacore when data allows
_VMEM_LIMIT_BYTES = 48 << 20    # > what we use; raises v5e's 16 MiB scoped default


def _relu_smooth_kernel(lam_ref, x_ref, o_ref):
    # lam_ref: SMEM (2,) f32 = [lam, 1/lam]  (runtime scalars -> no recompile per lam)
    x = x_ref[...]
    # Keep bf16 data in bf16 through the transcendentals (bf16 EUP on v6e/v7x);
    # other dtypes compute in f32. lam scalars stay f32 (32-bit sregs) and are
    # splat-multiplied against f32 vectors to avoid bf16 scalar conversions.
    cdt = jnp.bfloat16 if x.dtype == jnp.bfloat16 else jnp.float32
    z32 = x.astype(jnp.float32) * lam_ref[0]
    z = z32.astype(cdt)
    # numerically stable softplus: log(1+exp(z)) = max(z,0) + log1p(exp(-|z|))
    sp = jnp.maximum(z, 0.0) + jnp.log1p(jnp.exp(-jnp.abs(z)))
    out32 = sp.astype(jnp.float32) * lam_ref[1]   # divide precomputed as 1/lam
    o_ref[...] = out32.astype(o_ref.dtype)


def _round_up(a, b):
    return (a + b - 1) // b * b


def _pick_block(total_units, default_units, unit_multiple):
    """Block size (in `unit_multiple` units) that (a) is hardware-aligned,
    (b) doesn't exceed the default, and (c) is small enough that the grid has
    at least _MIN_GRID_STEPS steps whenever the array is large enough."""
    block = max(unit_multiple, _round_up(int(default_units), unit_multiple))
    cap = _round_up(pl.cdiv(total_units, _MIN_GRID_STEPS), unit_multiple)
    return max(min(block, cap), unit_multiple)


def relu_smooth(x, lam=3.0, block_rows=_DEFAULT_BLOCK_ROWS):
    orig_shape = x.shape
    orig_dtype = x.dtype
    n = x.size
    if n == 0:
        return x

    # lam / 1/lam as SMEM runtime scalars.
    lam_arr = jnp.array([lam, 1.0 / lam], dtype=jnp.float32)
    lam_spec = pl.BlockSpec(memory_space=pltpu.MemorySpace.SMEM)

    flat = x.reshape(-1)  # contiguous -> free bitcast, no HBM copy

    if n % LANES == 0:
        # Lane-dense (rows, 128) slab, tiled over rows.
        rows = n // LANES
        brows = _pick_block(rows, block_rows, SUBLANES)
        grid = (pl.cdiv(rows, brows),)
        data = flat.reshape(rows, LANES)
        data_spec = pl.BlockSpec((brows, LANES), lambda i: (i, 0))
        out_spec = pl.BlockSpec((brows, LANES), lambda i: (i, 0))
        out_shape = jax.ShapeDtypeStruct((rows, LANES), orig_dtype)
    else:
        # Non-128-multiple sizes: run directly on the unpadded flat 1-D array
        # with a 128*k-element block; Pallas masks the trailing partial block.
        # This avoids the full-array HBM copies a jnp.pad + tail slice costs.
        # TODO(synk): if the 1-D layout proves slower than lane-dense 2-D on
        # huge awkward sizes, peel the <128-element tail into a separate call.
        belems = _pick_block(n, block_rows * LANES, SUBLANES * LANES)
        grid = (pl.cdiv(n, belems),)
        data = flat
        data_spec = pl.BlockSpec((belems,), lambda i: (i,))
        out_spec = pl.BlockSpec((belems,), lambda i: (i,))
        out_shape = jax.ShapeDtypeStruct((n,), orig_dtype)

    itemsize = jnp.dtype(orig_dtype).itemsize
    cost = pl.CostEstimate(
        flops=6 * n,
        transcendentals=2 * n,
        bytes_accessed=2 * n * itemsize,
    )

    out = pl.pallas_call(
        _relu_smooth_kernel,
        out_shape=out_shape,
        grid=grid,
        in_specs=[lam_spec, data_spec],
        out_specs=out_spec,
        compiler_params=pltpu.CompilerParams(
            dimension_semantics=("parallel",),
            vmem_limit_bytes=_VMEM_LIMIT_BYTES,
        ),
        cost_estimate=cost,
    )(lam_arr, data)

    return out.reshape(orig_shape)


if __name__ == "__main__":
    lam = 3.0

    # 1) small NCHW f32 input (conv-style activation), size divisible by 128
    x = jax.random.normal(jax.random.PRNGKey(0), (2, 4, 16, 16), dtype=jnp.float32)
    y = jax.block_until_ready(relu_smooth(x, lam=lam))
    y_ref = jax.nn.softplus(lam * x) / lam  # stable form of log(1+exp(lam*x))/lam
    assert y.shape == x.shape and y.dtype == x.dtype
    assert jnp.allclose(y, y_ref, atol=1e-5, rtol=1e-5)

    # 2) non-128-divisible size -> unpadded flat 1-D path with a partial block
    x2 = jax.random.normal(jax.random.PRNGKey(1), (3, 5, 17, 13), dtype=jnp.float32)
    y2 = jax.block_until_ready(relu_smooth(x2, lam=lam))
    y2_ref = jax.nn.softplus(lam * x2) / lam
    assert y2.shape == x2.shape and y2.dtype == x2.dtype
    assert jnp.allclose(y2, y2_ref, atol=1e-5, rtol=1e-5)

    # 3) bf16 input keeps the softplus transcendentals in bf16 (v6e/v7x EUP path)
    x3 = jax.random.normal(jax.random.PRNGKey(2), (2, 4, 16, 16)).astype(jnp.bfloat16)
    y3 = jax.block_until_ready(relu_smooth(x3, lam=lam))
    y3_ref = jax.nn.softplus(lam * x3.astype(jnp.float32)) / lam
    assert y3.dtype == x3.dtype
    assert jnp.allclose(y3.astype(jnp.float32), y3_ref, atol=5e-2, rtol=5e-2)

    # 4) different lam reuses the same compiled kernel (lam is an SMEM scalar)
    y4 = jax.block_until_ready(relu_smooth(x, lam=7.5))
    y4_ref = jax.nn.softplus(7.5 * x) / 7.5
    assert jnp.allclose(y4, y4_ref, atol=1e-5, rtol=1e-5)

    print("KERNEL_OK")
</pallas_src>

<mosaic_0001>
module attributes {stable_mosaic.version = 11 : i64} {
  func.func @_relu_smooth_kernel(%arg0: i32, %arg1: memref<2xf32, #tpu.memory_space<smem>>, %arg2: memref<8x128xf32, #tpu.memory_space<vmem>>, %arg3: memref<8x128xf32, #tpu.memory_space<vmem>>) attributes {dimension_semantics = [#tpu.dimension_semantics<parallel>], iteration_bounds = array<i64: 2>, scalar_prefetch = 0 : i64, scratch_operands = 0 : i64, tpu.core_type = #tpu.core_type<tc>, window_params = [{transform_indices = @transform_0, window_bounds = array<i64: 2>}, {transform_indices = @transform_1, window_bounds = array<i64: 8, 128>}, {transform_indices = @transform_2, window_bounds = array<i64: 8, 128>}]} {
    %c0 = arith.constant 0 : index
    %c0_0 = arith.constant 0 : index
    %0 = vector.load %arg2[%c0, %c0_0] : memref<8x128xf32, #tpu.memory_space<vmem>>, vector<8x128xf32>
    %c0_1 = arith.constant 0 : index
    %1 = memref.load %arg1[%c0_1] : memref<2xf32, #tpu.memory_space<smem>>
    %2 = vector.broadcast %1 : f32 to vector<8x128xf32>
    %3 = arith.mulf %0, %2 : vector<8x128xf32>
    %cst = arith.constant 0.000000e+00 : f32
    %4 = vector.broadcast %cst : f32 to vector<8x128xf32>
    %5 = arith.maximumf %3, %4 : vector<8x128xf32>
    %6 = math.absf %3 : vector<8x128xf32>
    %cst_2 = arith.constant 0.000000e+00 : f32
    %7 = vector.broadcast %cst_2 : f32 to vector<8x128xf32>
    %8 = arith.subf %7, %6 : vector<8x128xf32>
    %9 = math.exp %8 : vector<8x128xf32>
    %10 = math.log1p %9 : vector<8x128xf32>
    %11 = arith.addf %5, %10 : vector<8x128xf32>
    %c1 = arith.constant 1 : index
    %12 = memref.load %arg1[%c1] : memref<2xf32, #tpu.memory_space<smem>>
    %13 = vector.broadcast %12 : f32 to vector<8x128xf32>
    %14 = arith.mulf %11, %13 : vector<8x128xf32>
    %c0_3 = arith.constant 0 : index
    %c0_4 = arith.constant 0 : index
    %15 = vector.load %arg3[%c0_3, %c0_4] : memref<8x128xf32, #tpu.memory_space<vmem>>, vector<8x128xf32>
    tpu.vector_store %arg3[%c0_3, %c0_4], %14 {strides = array<i32>} : memref<8x128xf32, #tpu.memory_space<vmem>>, vector<8x128xf32>,
    return
  }
  func.func @transform_0(%arg0: i32) -> i32 {
    %c0_i32 = arith.constant 0 : i32
    %c0_i32_0 = arith.constant 0 : i32
    return %c0_i32 : i32
  }
  func.func @transform_1(%arg0: i32) -> (i32, i32) {
    %c0_i32 = arith.constant 0 : i32
    %c0_i32_0 = arith.constant 0 : i32
    return %arg0, %c0_i32 : i32, i32
  }
  func.func @transform_2(%arg0: i32) -> (i32, i32) {
    %c0_i32 = arith.constant 0 : i32
    %c0_i32_0 = arith.constant 0 : i32
    return %arg0, %c0_i32 : i32, i32
  }
}

</mosaic_0001>

<llo_original>
// kernel: tpu_custom_call.1
$region0: #{tpu_custom_call.1}
  #allocation0 [shape = 'u32[]', space=smem, size = 0x4, offset = 0x4, fixed_abs, tag = 'smem constant byte address 0x4 - core index']
  #allocation1 [shape = 'u32[144,128]{1,0:T(1,128)}', space=vmem, size = 0x12000, scoped, tag = 'internal scratch']
  %s0 = inlined_call_operand.hbm [shape: f32[2], index: 0, kind: input, shape index: {}]
  %s1 = inlined_call_operand.hbm [shape: f32[16,128], index: 1, kind: input, shape index: {}]
  %s2 = inlined_call_operand.hbm [shape: f32[16,128], index: 2, kind: output, shape index: {}]
  %s3 = sld [smem:[#allocation0]]
  $region49: #{tpu_custom_call.1} parent=0
    _
  %s5 = ssub.s32 1, %s3
  %s6 = scalar_select 0, %s5, %s3
  $region1: #{tpu_custom_call.1} parent=0
    #allocation2 [shape = 'u8[512]{0}', space=smem, size = 0x200, scoped, tag = 'input window, operand 0, single buffered']
    #allocation3 [shape = 's32[2]{0}', space=sflag, size = 0x8, scoped, tag = 'scoped memory for tpu_custom_call.1']
    #allocation4 [shape = 's32[2]{0}', space=sflag, size = 0x8, scoped, tag = 'scoped memory for tpu_custom_call.1']
    #allocation5 [shape = 's32[2]{0}', space=sflag, size = 0x8, scoped, tag = 'scoped memory for tpu_custom_call.1']
    #allocation6 [shape = 'u8[8192]{0}', space=vmem, size = 0x2000, scoped, tag = 'input window, operand 1']
    #allocation7 [shape = 'u8[8192]{0}', space=vmem, size = 0x2000, scoped, tag = 'output window, operand 0']
    %7 = vsyncpa [#allocation5], 0
    %8 = vsyncpa [#allocation3], 0
    %s9 = scalar_lea.sflag [#allocation3], 1
    %10 = vsyncpa %s9, 0
    %11 = vsyncpa [#allocation4], 0
    %s12 = scalar_lea.sflag [#allocation4], 1
    %13 = vsyncpa %s12, 0
    loop: start=0, step=1, limit=4
    $region2: #{tpu_custom_call.1} parent=1 // loop_pre_header
      _
    $region3: #{tpu_custom_call.1} parent=1 // loop_header
      %s15 = sphi 0, %s19
      %p16 = scmp.ge.s32.totalorder %s15, 4
      %s23 = sphi 0, %s23
      %s25 = sphi 0, %s23
      %s26 = sphi 0, %s25
      %s40 = sphi 0, %s26
      %s46 = sphi 0, %s48
      %s49 = sphi 0, %s46
      %s50 = sphi 0, %s49
      %s66 = sphi 0, %s50
      %s72 = sphi 0, %s74
      %s75 = sphi 0, %s72
      %s76 = sphi 0, %s75
      %s92 = sphi 0, %s76
    $region4: #{tpu_custom_call.1} parent=1 // loop_header_branch
      %18 = sbr.rel (%p16) target = $region8
    $region5: #{tpu_custom_call.1} parent=1 // loop_body
      %s20 = ssub.s32 %s15, 1
      %s21 = ssub.s32 %s15, 2
      %s22 = sadd.s32 %s15, 1
      %s24 = sadd.s32 %s23, 1
      %p27 = scmp.eq.s32.totalorder %s15, 1
      %p28 = scmp.ne.s32.totalorder %s23, %s25
      %p29 = scmp.eq.s32.totalorder %s15, 0
      %p30 = por %p28, %p29
      %p31 = scmp.ne.s32.totalorder %s23, %s25
      %p32 = scmp.eq.s32.totalorder %s20, 1
      %p33 = por %p31, %p32
      %p34 = scmp.ne.s32.totalorder %s25, %s26
      %p35 = scmp.eq.s32.totalorder %s20, 0
      %p36 = por %p34, %p35
      %p37 = scmp.ne.s32.totalorder %s25, %s26
      %p38 = scmp.eq.s32.totalorder %s21, 1
      %p39 = por %p37, %p38
      %p41 = scmp.ne.s32.totalorder %s26, %s40
      %p42 = scmp.eq.s32.totalorder %s21, 0
      %p43 = por %p41, %p42
      %s44 = ssub.s32 %s15, %s22
      %p45 = scmp.eq.s32.totalorder %s44, 0
      %s47 = sadd.s32 %s46, 1
      %s48 = scalar_select %p45, %s46, %s47
      %p51 = pneg %p45
      %p52 = scmp.eq.s32.totalorder %s15, 1
      %p53 = por %p51, %p52
      %p54 = scmp.ne.s32.totalorder %s46, %s49
      %p55 = scmp.eq.s32.totalorder %s15, 0
      %p56 = por %p54, %p55
      %p57 = scmp.ne.s32.totalorder %s46, %s49
      %p58 = scmp.eq.s32.totalorder %s20, 1
      %p59 = por %p57, %p58
      %p60 = scmp.ne.s32.totalorder %s49, %s50
      %p61 = scmp.eq.s32.totalorder %s20, 0
      %p62 = por %p60, %p61
      %p63 = scmp.ne.s32.totalorder %s49, %s50
      %p64 = scmp.eq.s32.totalorder %s21, 1
      %p65 = por %p63, %p64
      %p67 = scmp.ne.s32.totalorder %s50, %s66
      %p68 = scmp.eq.s32.totalorder %s21, 0
      %p69 = por %p67, %p68
      %s70 = ssub.s32 %s15, %s22
      %p71 = scmp.eq.s32.totalorder %s70, 0
      %s73 = sadd.s32 %s72, 1
      %s74 = scalar_select %p71, %s72, %s73
      %p77 = pneg %p71
      %p78 = scmp.eq.s32.totalorder %s15, 1
      %p79 = por %p77, %p78
      %p80 = scmp.ne.s32.totalorder %s72, %s75
      %p81 = scmp.eq.s32.totalorder %s15, 0
      %p82 = por %p80, %p81
      %p83 = scmp.ne.s32.totalorder %s72, %s75
      %p84 = scmp.eq.s32.totalorder %s20, 1
      %p85 = por %p83, %p84
      %p86 = scmp.ne.s32.totalorder %s75, %s76
      %p87 = scmp.eq.s32.totalorder %s20, 0
      %p88 = por %p86, %p87
      %p89 = scmp.ne.s32.totalorder %s75, %s76
      %p90 = scmp.eq.s32.totalorder %s21, 1
      %p91 = por %p89, %p90
      %p93 = scmp.ne.s32.totalorder %s76, %s92
      %p94 = scmp.eq.s32.totalorder %s21, 0
      %p95 = por %p93, %p94
      %p96 = scmp.le.s32.totalorder 1, %s15
      %p97 = scmp.lt.s32.totalorder %s15, 3
      %p98 = pnand %p96, %p97
      %p99 = pneg %p98
      // Predicated region
      $region9: #{tpu_custom_call.1} parent=5 // pred_check
        _
      $region10: #{tpu_custom_call.1} parent=5 // pred_check_branch
        %101 = sbr.rel (%p98) target = $region12
      $region11: #{tpu_custom_call.1} parent=5 // pred_region
        %s102 = ssub.s32 %s15, 1
        // Predicated region
        $region13: #{tpu_custom_call.1} parent=11 // pred_check
          %p103 = pneg %p36
        $region14: #{tpu_custom_call.1} parent=11 // pred_check_branch
          %105 = sbr.rel (%p103) target = $region16
        $region15: #{tpu_custom_call.1} parent=11 // pred_region
          %s107 = ssub.s32 16, 16
          %108 = vsyncadd [#allocation5], %s107
          %111 = dma.hbm_to_smem %s0, 16, [#allocation2], [#allocation5]
        $region16: #{tpu_custom_call.1} parent=11 // pred_fallthru
          _
      $region12: #{tpu_custom_call.1} parent=5 // pred_fallthru
        _
      %p112 = scmp.lt.s32.totalorder %s15, 2
      // Predicated region
      $region17: #{tpu_custom_call.1} parent=5 // pred_check
        %p113 = pneg %p112
      $region18: #{tpu_custom_call.1} parent=5 // pred_check_branch
        %115 = sbr.rel (%p113) target = $region20
      $region19: #{tpu_custom_call.1} parent=5 // pred_region
        // Predicated region
        $region21: #{tpu_custom_call.1} parent=19 // pred_check
          %p116 = pneg %p56
        $region22: #{tpu_custom_call.1} parent=19 // pred_check_branch
          %118 = sbr.rel (%p116) target = $region24
        $region23: #{tpu_custom_call.1} parent=19 // pred_region
          %s119 = sand.u32 %s46, 1
          %s120 = scalar_lea.sflag [#allocation3], %s119
          %s121 = sand.u32 %s46, 1
          %s122 = smul.addr %s121, 8
          %s123 = scalar_lea.vmem [#allocation6], %s122
          %s125 = ssub.s32 128, 128
          %126 = vsyncadd %s120, %s125
          %s127 = smul.addr %s15, 128
          %s128 = scalar_lea.hbm %s1, %s127
          %s130 = sshll.u32 %s123, 4
          %s131 = int_to_ptr.vmem [resolvable:$true] %s130
          %133 = dma.hbm_to_vmem [thread:$0]  %s128, 128, %s131, %s120
        $region24: #{tpu_custom_call.1} parent=19 // pred_fallthru
          _
      $region20: #{tpu_custom_call.1} parent=5 // pred_fallthru
        _
      %p134 = scmp.le.s32.totalorder 1, %s15
      %p135 = scmp.lt.s32.totalorder %s15, 3
      %p136 = pnand %p134, %p135
      %p137 = pneg %p136
      // Predicated region
      $region25: #{tpu_custom_call.1} parent=5 // pred_check
        _
      $region26: #{tpu_custom_call.1} parent=5 // pred_check_branch
        %139 = sbr.rel (%p136) target = $region28
      $region27: #{tpu_custom_call.1} parent=5 // pred_region
        %s140 = ssub.s32 %s15, 1
        // Predicated region
        $region29: #{tpu_custom_call.1} parent=27 // pred_check
          %p141 = pneg %p36
        $region30: #{tpu_custom_call.1} parent=27 // pred_check_branch
          %143 = sbr.rel (%p141) target = $region32
        $region31: #{tpu_custom_call.1} parent=27 // pred_region
          %144 = dma.done [#allocation5], 16
        $region32: #{tpu_custom_call.1} parent=27 // pred_fallthru
          _
        %s145 = sand.u32 %s49, 1
        %s146 = scalar_lea.sflag [#allocation3], %s145
        %s147 = sand.u32 %s49, 1
        %s148 = smul.addr %s147, 8
        %s149 = scalar_lea.vmem [#allocation6], %s148
        // Predicated region
        $region33: #{tpu_custom_call.1} parent=27 // pred_check
          %p150 = pneg %p62
        $region34: #{tpu_custom_call.1} parent=27 // pred_check_branch
          %152 = sbr.rel (%p150) target = $region36
        $region35: #{tpu_custom_call.1} parent=27 // pred_region
          %153 = dma.done %s146, 128
        $region36: #{tpu_custom_call.1} parent=27 // pred_fallthru
          _
        %154 = sfence
        %p155 = pneg %p36
        %p156 = pneg %p33
        %s157 = sand.u32 %s49, 1
        %s158 = scalar_lea.sflag [#allocation3], %s157
        %s159 = sand.u32 %s49, 1
        %s160 = smul.addr %s159, 8
        %s161 = scalar_lea.vmem [#allocation6], %s160
        %p162 = pneg %p62
        %p163 = pneg %p59
        %p164 = pneg %p88
        %p165 = pneg %p85
        %s166 = sand.u32 %s75, 1
        %s167 = scalar_lea.sflag [#allocation4], %s166
        %s168 = sand.u32 %s75, 1
        %s169 = smul.addr %s168, 8
        %s170 = scalar_lea.vmem [#allocation7], %s169
        %v171 = vld [vmem:[%s149] sm:$0xff]
        %s172 = sld [smem:[#allocation2]]
        %v173 = vstv %s172
        %v174 = vmul.f32 %v171, %v173
        %v175 = vmax.f32 %v174, 0.0
        %v176 = vand.u32 2147483647, %v174
        %v177 = vsub.f32 0.0, %v176
        %v178 = vmul.f32 %v177, 1.442695
        %v179 = vpow.pop %v178
        %v180 = vadd.f32 %v179, 1.0
        %v181 = vlog2.pop %v180
        %v182 = vmul.f32 %v181, 0.6931472
        %v183 = vmul.f32 -0.5, %v179
        %v184 = vadd.f32 %v183, 1.0
        %v185 = vmul.f32 %v184, %v179
        %v186 = vand.u32 2147483647, %v179
        %vm187 = vcmp.lt.f32.partialorder %v186, 0.0004427343
        %v188 = vsel %vm187, %v185, %v182
        %v189 = vadd.f32 %v175, %v188
        %s190 = sld [smem:[#allocation2 + $0x1]]
        %v191 = vstv %s190
        %v192 = vmul.f32 %v189, %v191
        %193 = vst [vmem:[%s170] sm:$0xff] %v192
        %s194 = sand.u32 %s75, 1
        %s195 = scalar_lea.sflag [#allocation4], %s194
        %s196 = sand.u32 %s75, 1
        %s197 = smul.addr %s196, 8
        %s198 = scalar_lea.vmem [#allocation7], %s197
        // Predicated region
        $region37: #{tpu_custom_call.1} parent=27 // pred_check
          %p199 = pneg %p85
        $region38: #{tpu_custom_call.1} parent=27 // pred_check_branch
          %201 = sbr.rel (%p199) target = $region40
        $region39: #{tpu_custom_call.1} parent=27 // pred_region
          %s203 = ssub.s32 128, 128
          %204 = vsyncadd %s195, %s203
          %s205 = smul.addr %s20, 128
          %s206 = scalar_lea.hbm %s2, %s205
          %s208 = sshll.u32 %s198, 4
          %s209 = int_to_ptr.vmem [resolvable:$true] %s208
          %211 = dma.vmem_to_hbm [thread:$0]  %s209, 128, %s206, %s195
        $region40: #{tpu_custom_call.1} parent=27 // pred_fallthru
          _
      $region28: #{tpu_custom_call.1} parent=5 // pred_fallthru
        _
      %p212 = scmp.le.s32.totalorder 2, %s15
      // Predicated region
      $region41: #{tpu_custom_call.1} parent=5 // pred_check
        %p213 = pneg %p212
      $region42: #{tpu_custom_call.1} parent=5 // pred_check_branch
        %215 = sbr.rel (%p213) target = $region44
      $region43: #{tpu_custom_call.1} parent=5 // pred_region
        %s216 = ssub.s32 %s15, 2
        // Predicated region
        $region45: #{tpu_custom_call.1} parent=43 // pred_check
          %p217 = pneg %p91
        $region46: #{tpu_custom_call.1} parent=43 // pred_check_branch
          %219 = sbr.rel (%p217) target = $region48
        $region47: #{tpu_custom_call.1} parent=43 // pred_region
          %s220 = sand.u32 %s76, 1
          %s221 = scalar_lea.sflag [#allocation4], %s220
          %s222 = sand.u32 %s76, 1
          %s223 = smul.addr %s222, 8
          %s224 = scalar_lea.vmem [#allocation7], %s223
          %225 = dma.done %s221, 128
        $region48: #{tpu_custom_call.1} parent=43 // pred_fallthru
          _
      $region44: #{tpu_custom_call.1} parent=5 // pred_fallthru
        _
    $region6: #{tpu_custom_call.1} parent=1 // loop_footer
      %s19 = sadd.s32 1, %s15
    $region7: #{tpu_custom_call.1} parent=1 // loop_footer_branch
      %14 = sbr.rel target = $region3
    $region8: #{tpu_custom_call.1} parent=1 // loop_exit
      _
    %226 = vsyncpa [#allocation3], 1
    %s227 = scalar_lea.sflag [#allocation3], 1
    %228 = vsyncpa %s227, 1
    %229 = vsyncpa [#allocation4], 1
    %s230 = scalar_lea.sflag [#allocation4], 1
    %231 = vsyncpa %s230, 1
    %232 = vsyncpa [#allocation5], 1
    %s233 = scalar_lea.sflag [#allocation5], 1
    %234 = vsyncpa %s233, 1

</llo_original>
